<compile_context>
chip_gen: v6e
topology: v6e:2x2x1
jax: 0.10.0
libtpu: 0.0.40
codegen_flags: <defaults>
</compile_context>

<pallas_src>
import functools
import types

import jax
import jax.numpy as jnp
from jax.experimental import pallas as pl
from jax.experimental.pallas import tpu as pltpu

# Explicit scoped-VMEM budget: v5e's default is 16 MiB (of 128 MiB physical); 64 MiB
# also fits v7x's 64 MiB physical VMEM.
_VMEM_LIMIT_BYTES = 64 * 1024 * 1024


def _round_up(x, m):
    return ((x + m - 1) // m) * m


# --------------------------------------------------------------------------
# Fused encoder + decoder kernel (one launch for every transform).
#   z   = tanh(x @ [w_enc | w_aux | 0] + b)   (columns [:hidden] = h; padded cols = 0)
#   dec = z @ w_dec + b_dec                   (z IS torch.cat([h, aux], 1), zero-padded)
# --------------------------------------------------------------------------
def _encdec_kernel(x_ref, wea_ref, bea_ref, wd_ref, bd_ref, enc_ref, dec_ref):
    # Weights arrive as bf16 straight from HBM (pre-cast once in make_params), so there
    # is no per-grid-step f32->bf16 cast of constant operands.
    x = x_ref[...].astype(jnp.bfloat16)
    z = jnp.tanh(
        jnp.dot(x, wea_ref[...], preferred_element_type=jnp.float32) + bea_ref[...])
    enc_ref[...] = z                       # zdim padded to 128 -> lane-dense store
    # TODO(synk): for zdim in the hundreds+, chunk the tanh + decoder matmul
    # (lax.fori_loop, unroll=True) so the EUP tanh hides under the second MXU matmul.
    dec_ref[...] = (
        jnp.dot(z.astype(jnp.bfloat16), wd_ref[...],
                preferred_element_type=jnp.float32) + bd_ref[...])


def pallas_encdec(x_all, params, *, row_block=128):
    """x_all: (M, in_dim) f32. Returns (enc (M, zdim_pad) f32, dec (M, in_dim) f32)."""
    m, in_dim = x_all.shape
    wea, bea = params["w_encaux"], params["b_encaux"]
    wd, bd = params["w_dec"], params["b_dec"]
    zdim = wea.shape[1]

    # TODO(synk): tile in_dim (encoder contraction / decoder output N) for very large
    # C*H*W; the current full-width (tm, in_dim) blocks assume they fit VMEM.
    tm = _round_up(m, 8) if m <= row_block else row_block
    mpad = _round_up(m, tm)
    if mpad != m:
        x_all = jnp.pad(x_all, ((0, mpad - m), (0, 0)))

    enc, dec = pl.pallas_call(
        _encdec_kernel,
        out_shape=(jax.ShapeDtypeStruct((mpad, zdim), jnp.float32),
                   jax.ShapeDtypeStruct((mpad, in_dim), jnp.float32)),
        grid_spec=pltpu.PrefetchScalarGridSpec(
            num_scalar_prefetch=0,
            grid=(mpad // tm,),
            in_specs=[pl.BlockSpec((tm, in_dim), lambda i: (i, 0)),
                      pl.BlockSpec((in_dim, zdim), lambda i: (0, 0)),
                      pl.BlockSpec((1, zdim), lambda i: (0, 0)),
                      pl.BlockSpec((zdim, in_dim), lambda i: (0, 0)),
                      pl.BlockSpec((1, in_dim), lambda i: (0, 0))],
            out_specs=(pl.BlockSpec((tm, zdim), lambda i: (i, 0)),
                       pl.BlockSpec((tm, in_dim), lambda i: (i, 0)))),
        compiler_params=pltpu.CompilerParams(
            dimension_semantics=("parallel",),
            vmem_limit_bytes=_VMEM_LIMIT_BYTES),
    )(x_all, wea, bea, wd, bd)
    return enc[:m], dec[:m]


# --------------------------------------------------------------------------
# Grouped / row-tiled generalized NT-Xent kernel.
#
# Per group (K = N*BS rows):
#   sim      = CosineSimilarity(row_i, row_j) / temperature
#   positives: i != j and i ≡ j (mod BS);  negatives: i != j and i ≢ j (mod BS)
#   loss     = sum over positives (r, j) of  logsumexp([sim[r,j]] ++ sim[r, neg(r)]) - sim[r,j]
# (exactly the summed CrossEntropy(label=0, reduction='sum') of the torch code;
#  the /Kpos normalization is applied in the wrapper.)
# --------------------------------------------------------------------------
def _ntxent_kernel(s_ref, out_ref, shat_ref, acc_ref, *,
                   BS, K, TM, temperature, padded, use_log1p):
    ri = pl.program_id(1)
    nr = pl.num_programs(1)
    kpad = s_ref.shape[0]

    # ---- once per group (ri == 0): normalize the whole slab into a bf16 scratch ----
    @pl.when(ri == 0)
    def _():
        acc_ref[...] = jnp.zeros_like(acc_ref)
        s = s_ref[...].astype(jnp.float32)
        # NOTE: torch.nn.CosineSimilarity clamps the *product* of norms at 1e-8; this
        # per-vector clamp only differs for near-zero-norm rows (never hit here).
        inv_norm = jax.lax.rsqrt(
            jnp.maximum(jnp.sum(s * s, axis=1, keepdims=True), jnp.float32(1e-16)))
        shat_ref[...] = (s * inv_norm).astype(jnp.bfloat16)

    # ---- every row block: bf16 MXU gram against the resident normalized slab ----
    row0 = pl.multiple_of(ri * TM, TM)
    inv_t = jnp.asarray(1.0 / temperature, dtype=jnp.bfloat16)
    r_hat = shat_ref[pl.ds(row0, TM), :] * inv_t          # 1/T folded on the row side
    sim = jax.lax.dot_general(                            # (TM, Kpad) = cos/T
        r_hat, shat_ref[...],
        dimension_numbers=(((1,), (1,)), ((), ())),
        preferred_element_type=jnp.float32)

    # Masks from vector iotas (no K×K int temporaries).
    row_ids = row0 + jax.lax.broadcasted_iota(jnp.int32, (TM, 1), 0)
    col_ids = jax.lax.broadcasted_iota(jnp.int32, (1, kpad), 1)
    off_diag = row_ids != col_ids
    same_slot = (row_ids % BS) == (col_ids % BS)
    if padded:
        valid = (row_ids < K) & (col_ids < K)
        is_pos = valid & off_diag & same_slot
        is_neg = valid & off_diag & jnp.logical_not(same_slot)
    else:  # Kpad == K: the always-true validity mask is specialized away
        is_pos = off_diag & same_slot
        is_neg = off_diag & jnp.logical_not(same_slot)

    neg_sim = jnp.where(is_neg, sim, jnp.float32(-1e30))   # mask BEFORE the exp
    neg_max = jnp.max(neg_sim, axis=1, keepdims=True)
    neg_sumexp = jnp.sum(jnp.exp(neg_sim - neg_max), axis=1, keepdims=True)
    if use_log1p:
        # log1p rewrite: lse - sim = log(1 + sum_neg exp(neg - sim)).  The argument is
        # >= 0 so the log(1+x) form is cancellation-free; 1 exp + 1 log per element.
        lse_minus_sim = jnp.log(1.0 + neg_sumexp * jnp.exp(neg_max - sim))
    else:
        # tiny-temperature fallback (exp(neg_max - sim) could overflow): keep the
        # max-shifted two-exp form.
        m = jnp.maximum(sim, neg_max)
        lse_minus_sim = (jnp.log(jnp.exp(sim - m) + neg_sumexp * jnp.exp(neg_max - m))
                         + m - sim)
    acc_ref[...] += jnp.sum(jnp.where(is_pos, lse_minus_sim, 0.0))

    # ---- per-group finalize: lane-dense (8, 128) scalar tile for this group ----
    @pl.when(ri == nr - 1)
    def _():
        out_ref[...] = jnp.broadcast_to(acc_ref[...], out_ref.shape)


def ntxent_loss_grouped(s, n, batch_size, temperature, *, row_block=128):
    """s: (G, K, D) with K = n*batch_size; each group is torch.cat(sim_i, 0).
    Returns the per-group generalized NT-Xent losses (already /Kpos), shape (G,)."""
    g, k, d = s.shape
    assert k == n * batch_size
    # Row block a multiple of 16 so the bf16 slab / scratch stay sublane-tile aligned.
    tm = _round_up(k, 16) if k <= row_block else row_block
    kpad = _round_up(k, tm)
    padded = kpad != k
    if padded:
        s = jnp.pad(s, ((0, 0), (0, kpad - k), (0, 0)))
    # log1p form is safe while 2/temperature stays well below exp overflow (~T > 1/30).
    use_log1p = (2.0 / float(temperature)) < 60.0

    kernel = functools.partial(_ntxent_kernel, BS=batch_size, K=k, TM=tm,
                               temperature=float(temperature), padded=padded,
                               use_log1p=use_log1p)
    # TODO(synk): add a D-tiled (contraction-tiled) variant for very large D
    # (D = C*H*W at real image sizes); the resident (Kpad, D) slab assumes it fits VMEM.
    out = pl.pallas_call(
        kernel,
        out_shape=jax.ShapeDtypeStruct((g, 8, 128), jnp.float32),
        grid_spec=pltpu.PrefetchScalarGridSpec(
            num_scalar_prefetch=0,
            grid=(g, kpad // tm),            # group axis first, row-block (revisit) axis last
            in_specs=[pl.BlockSpec((None, kpad, d), lambda gi, ri: (gi, 0, 0))],
            out_specs=pl.BlockSpec((None, 8, 128), lambda gi, ri: (gi, 0, 0)),
            scratch_shapes=[pltpu.VMEM((kpad, d), jnp.bfloat16),   # normalized slab
                            pltpu.VMEM((1, 1), jnp.float32)]),     # per-group accumulator
        compiler_params=pltpu.CompilerParams(
            # Per-group outputs + per-group scratch re-init make the group axis safe to
            # shard across v7x's two TensorCores; the row-block axis carries state.
            dimension_semantics=("parallel", "arbitrary"),
            vmem_limit_bytes=_VMEM_LIMIT_BYTES),
    )(s.astype(jnp.bfloat16))                # bf16 slab in HBM: half the DMA / VMEM
    kpos = float(n * (n - 1) * batch_size)
    return out[:, 0, 0] / kpos


# --------------------------------------------------------------------------
# Synthetic (deterministic) encoder / decoder parameters — stand-ins for
# models.enc_c / models.dec, which are external to the reference module.
# zdim = hidden + aux is zero-padded to a multiple of 128 (lane-dense); the padded
# z columns are tanh(0) = 0 and the padded decoder rows are 0, so the model output
# is identical to the unpadded one.
# --------------------------------------------------------------------------
def make_params(key, in_dim, hidden, aux_dim):
    k1, k2, k3 = jax.random.split(key, 3)
    scale = 0.02
    w_enc = scale * jax.random.normal(k1, (in_dim, hidden), jnp.float32)
    w_aux = scale * jax.random.normal(k2, (in_dim, aux_dim), jnp.float32)
    zdim = hidden + aux_dim
    zdim_pad = _round_up(zdim, 128)
    w_encaux = jnp.concatenate(
        [w_enc, w_aux, jnp.zeros((in_dim, zdim_pad - zdim), jnp.float32)], axis=1)
    w_dec = jnp.concatenate(
        [scale * jax.random.normal(k3, (zdim, in_dim), jnp.float32),
         jnp.zeros((zdim_pad - zdim, in_dim), jnp.float32)], axis=0)
    return {
        "hidden": hidden,
        # Weights pre-cast to bf16 once (HBM side): no per-step cast in the kernel.
        "w_encaux": w_encaux.astype(jnp.bfloat16),        # (in_dim, zdim_pad)
        "b_encaux": jnp.zeros((1, zdim_pad), jnp.float32),
        "w_dec": w_dec.astype(jnp.bfloat16),              # (zdim_pad, in_dim)
        "b_dec": jnp.zeros((1, in_dim), jnp.float32),
    }


# --------------------------------------------------------------------------
# Forward pass of DisentangleStaticNoiseLoss
# --------------------------------------------------------------------------
def disentangle_static_noise_loss(pic_set, params, hyperparams, batch_size):
    num_pics = len(pic_set)
    bs = batch_size
    temperature = hyperparams.temperature
    hidden = params["hidden"]

    # Flatten NCHW -> (BS, C*H*W) like torch.flatten(x, 1), stack all transforms so the
    # encoder + decoder run as ONE fused Pallas launch.
    x_all = jnp.concatenate([p.reshape(bs, -1) for p in pic_set], axis=0)   # (P*BS, D)
    in_dim = x_all.shape[1]
    enc_all, dec_all = pallas_encdec(x_all, params)     # (P*BS, zdim_pad), (P*BS, D)
    h_all = enc_all[:, :hidden]                         # simh rows, already stacked

    # Pair groups j = (flatten(pic_j), dec_{(j+1) mod P}) — reproduces the torch loop
    # pairs (pic_{i-1}, dec_i) plus (pic_{P-1}, dec_0) — all P groups in ONE launch.
    a_stack = x_all.reshape(num_pics, bs, in_dim)
    b_stack = jnp.roll(dec_all.reshape(num_pics, bs, in_dim), shift=-1, axis=0)
    pairs = jnp.concatenate([a_stack, b_stack], axis=1)                     # (P, 2*BS, D)
    loss_pairs = jnp.sum(ntxent_loss_grouped(pairs, 2, bs, temperature))

    loss_x = ntxent_loss_grouped(dec_all[None], num_pics, bs, temperature)[0]
    loss_h = ntxent_loss_grouped(h_all[None], num_pics, bs, temperature)[0]

    return loss_pairs / num_pics + hyperparams.x * loss_x + hyperparams.h * loss_h


# --------------------------------------------------------------------------
# Pure-JAX f32 reference (no Pallas) for a loose numerical cross-check.
# --------------------------------------------------------------------------
def _reference_loss(pic_set, params, hyperparams, batch_size):
    bs = batch_size
    P = len(pic_set)
    hidden = params["hidden"]
    x_all = jnp.concatenate([p.reshape(bs, -1) for p in pic_set], axis=0)
    wea = params["w_encaux"].astype(jnp.float32)
    wd = params["w_dec"].astype(jnp.float32)
    z = jnp.tanh(x_all @ wea + params["b_encaux"])
    dec = z @ wd + params["b_dec"]
    h = z[:, :hidden]

    def nt_xent(s, n):
        k = n * bs
        norms = jnp.sqrt(jnp.sum(s * s, axis=1, keepdims=True))
        simm = (s @ s.T) / jnp.maximum(norms * norms.T, 1e-8) / hyperparams.temperature
        r = jnp.arange(k)[:, None]
        c = jnp.arange(k)[None, :]
        pos = (r != c) & ((r % bs) == (c % bs))
        neg = (r != c) & ((r % bs) != (c % bs))
        neg_sum = jnp.sum(jnp.where(neg, jnp.exp(simm), 0.0), axis=1, keepdims=True)
        lse = jnp.log(jnp.exp(simm) + neg_sum)
        return jnp.sum(jnp.where(pos, lse - simm, 0.0)) / (n * (n - 1) * bs)

    x_list = [x_all[i * bs:(i + 1) * bs] for i in range(P)]
    dec_list = [dec[i * bs:(i + 1) * bs] for i in range(P)]
    loss_pairs = 0.0
    for i in range(1, P):
        loss_pairs += nt_xent(jnp.concatenate([x_list[i - 1], dec_list[i]], 0), 2)
    loss_pairs += nt_xent(jnp.concatenate([x_list[-1], dec_list[0]], 0), 2)
    loss_x = nt_xent(dec, P)
    loss_h = nt_xent(h, P)
    return loss_pairs / P + hyperparams.x * loss_x + hyperparams.h * loss_h


# --------------------------------------------------------------------------
if __name__ == "__main__":
    key = jax.random.PRNGKey(0)

    batch_size = 2
    num_transforms = 3          # masks in the torch module cover {2, T, T+1}
    C, H, W = 4, 8, 8
    hidden, aux_dim = 32, 16

    hyperparams = types.SimpleNamespace(x=1.0, h=1.0, temperature=0.5)

    key, pkey = jax.random.split(key)
    params = make_params(pkey, C * H * W, hidden, aux_dim)

    pic_keys = jax.random.split(key, num_transforms)
    pic_set = [
        jax.random.normal(pic_keys[t], (batch_size, C, H, W), jnp.float32)
        for t in range(num_transforms)
    ]

    loss = disentangle_static_noise_loss(pic_set, params, hyperparams, batch_size)
    loss = jax.block_until_ready(loss)
    assert jnp.isfinite(loss), f"non-finite loss: {loss}"

    # Loose cross-check vs. a pure-JAX f32 reference (kernel uses bf16 matmuls / slabs).
    ref = float(_reference_loss(pic_set, params, hyperparams, batch_size))
    got = float(loss)
    assert abs(got - ref) <= 5e-2 + 5e-2 * abs(ref), f"mismatch: pallas={got} ref={ref}"

    print("KERNEL_OK")
</pallas_src>

<mosaic_0001>
module attributes {stable_mosaic.version = 11 : i64} {
  func.func @_encdec_kernel(%arg0: i32, %arg1: memref<8x256xf32, #tpu.memory_space<vmem>>, %arg2: memref<256x128xbf16, #tpu.memory_space<vmem>>, %arg3: memref<1x128xf32, #tpu.memory_space<vmem>>, %arg4: memref<128x256xbf16, #tpu.memory_space<vmem>>, %arg5: memref<1x256xf32, #tpu.memory_space<vmem>>, %arg6: memref<8x128xf32, #tpu.memory_space<vmem>>, %arg7: memref<8x256xf32, #tpu.memory_space<vmem>>) attributes {dimension_semantics = [#tpu.dimension_semantics<parallel>], iteration_bounds = array<i64: 1>, scalar_prefetch = 0 : i64, scratch_operands = 0 : i64, tpu.core_type = #tpu.core_type<tc>, window_params = [{transform_indices = @transform_0, window_bounds = array<i64: 8, 256>}, {pipeline_mode = #tpu.pipeline_mode<synchronous>, transform_indices = @transform_1, window_bounds = array<i64: 256, 128>}, {pipeline_mode = #tpu.pipeline_mode<synchronous>, transform_indices = @transform_2, window_bounds = array<i64: 1, 128>}, {pipeline_mode = #tpu.pipeline_mode<synchronous>, transform_indices = @transform_3, window_bounds = array<i64: 128, 256>}, {pipeline_mode = #tpu.pipeline_mode<synchronous>, transform_indices = @transform_4, window_bounds = array<i64: 1, 256>}, {transform_indices = @transform_5, window_bounds = array<i64: 8, 128>}, {transform_indices = @transform_6, window_bounds = array<i64: 8, 256>}]} {
    %c0 = arith.constant 0 : index
    %c0_0 = arith.constant 0 : index
    %0 = vector.load %arg1[%c0, %c0_0] : memref<8x256xf32, #tpu.memory_space<vmem>>, vector<8x256xf32>
    %1 = arith.truncf %0 : vector<8x256xf32> to vector<8x256xbf16>
    %c0_1 = arith.constant 0 : index
    %c0_2 = arith.constant 0 : index
    %2 = vector.load %arg2[%c0_1, %c0_2] : memref<256x128xbf16, #tpu.memory_space<vmem>>, vector<256x128xbf16>
    %cst = arith.constant dense<0.000000e+00> : vector<8x128xf32>
    %3 = tpu.matmul %1, %2, %cst {dimension_numbers = #tpu.dot_dimension_numbers<[1], [0], [0], [1], [0, 0, 1, 1], [], []>} : vector<8x256xbf16>, vector<256x128xbf16>, vector<8x128xf32> -> vector<8x128xf32>
    %c0_3 = arith.constant 0 : index
    %c0_4 = arith.constant 0 : index
    %4 = vector.load %arg3[%c0_3, %c0_4] : memref<1x128xf32, #tpu.memory_space<vmem>>, vector<1x128xf32>
    %5 = vector.broadcast %4 : vector<1x128xf32> to vector<8x128xf32>
    %6 = arith.addf %3, %5 : vector<8x128xf32>
    %7 = math.tanh %6 : vector<8x128xf32>
    %c0_5 = arith.constant 0 : index
    %c0_6 = arith.constant 0 : index
    %8 = vector.load %arg6[%c0_5, %c0_6] : memref<8x128xf32, #tpu.memory_space<vmem>>, vector<8x128xf32>
    tpu.vector_store %arg6[%c0_5, %c0_6], %7 {strides = array<i32>} : memref<8x128xf32, #tpu.memory_space<vmem>>, vector<8x128xf32>,
    %9 = arith.truncf %7 : vector<8x128xf32> to vector<8x128xbf16>
    %c0_7 = arith.constant 0 : index
    %c0_8 = arith.constant 0 : index
    %10 = vector.load %arg4[%c0_7, %c0_8] : memref<128x256xbf16, #tpu.memory_space<vmem>>, vector<128x256xbf16>
    %cst_9 = arith.constant dense<0.000000e+00> : vector<8x256xf32>
    %11 = tpu.matmul %9, %10, %cst_9 {dimension_numbers = #tpu.dot_dimension_numbers<[1], [0], [0], [1], [0, 0, 1, 1], [], []>} : vector<8x128xbf16>, vector<128x256xbf16>, vector<8x256xf32> -> vector<8x256xf32>
    %c0_10 = arith.constant 0 : index
    %c0_11 = arith.constant 0 : index
    %12 = vector.load %arg5[%c0_10, %c0_11] : memref<1x256xf32, #tpu.memory_space<vmem>>, vector<1x256xf32>
    %13 = vector.broadcast %12 : vector<1x256xf32> to vector<8x256xf32>
    %14 = arith.addf %11, %13 : vector<8x256xf32>
    %c0_12 = arith.constant 0 : index
    %c0_13 = arith.constant 0 : index
    %15 = vector.load %arg7[%c0_12, %c0_13] : memref<8x256xf32, #tpu.memory_space<vmem>>, vector<8x256xf32>
    tpu.vector_store %arg7[%c0_12, %c0_13], %14 {strides = array<i32>} : memref<8x256xf32, #tpu.memory_space<vmem>>, vector<8x256xf32>,
    return
  }
  func.func @transform_0(%arg0: i32) -> (i32, i32) {
    %c0_i32 = arith.constant 0 : i32
    %c0_i32_0 = arith.constant 0 : i32
    return %arg0, %c0_i32 : i32, i32
  }
  func.func @transform_1(%arg0: i32) -> (i32, i32) {
    %c0_i32 = arith.constant 0 : i32
    %c0_i32_0 = arith.constant 0 : i32
    %c0_i32_1 = arith.constant 0 : i32
    return %c0_i32, %c0_i32_0 : i32, i32
  }
  func.func @transform_2(%arg0: i32) -> (i32, i32) {
    %c0_i32 = arith.constant 0 : i32
    %c0_i32_0 = arith.constant 0 : i32
    %c0_i32_1 = arith.constant 0 : i32
    return %c0_i32, %c0_i32_0 : i32, i32
  }
  func.func @transform_3(%arg0: i32) -> (i32, i32) {
    %c0_i32 = arith.constant 0 : i32
    %c0_i32_0 = arith.constant 0 : i32
    %c0_i32_1 = arith.constant 0 : i32
    return %c0_i32, %c0_i32_0 : i32, i32
  }
  func.func @transform_4(%arg0: i32) -> (i32, i32) {
    %c0_i32 = arith.constant 0 : i32
    %c0_i32_0 = arith.constant 0 : i32
    %c0_i32_1 = arith.constant 0 : i32
    return %c0_i32, %c0_i32_0 : i32, i32
  }
  func.func @transform_5(%arg0: i32) -> (i32, i32) {
    %c0_i32 = arith.constant 0 : i32
    %c0_i32_0 = arith.constant 0 : i32
    return %arg0, %c0_i32 : i32, i32
  }
  func.func @transform_6(%arg0: i32) -> (i32, i32) {
    %c0_i32 = arith.constant 0 : i32
    %c0_i32_0 = arith.constant 0 : i32
    return %arg0, %c0_i32 : i32, i32
  }
}

</mosaic_0001>

<llo_original>
// kernel: tpu_custom_call.1
$region0: #{tpu_custom_call.1}
  #allocation0 [shape = 'u32[]', space=smem, size = 0x4, offset = 0x4, fixed_abs, tag = 'smem constant byte address 0x4 - core index']
  #allocation1 [shape = 'u32[144,128]{1,0:T(1,128)}', space=vmem, size = 0x12000, scoped, tag = 'internal scratch']
  %s0 = inlined_call_operand.hbm [shape: f32[8,256], index: 0, kind: input, shape index: {}]
  %s1 = inlined_call_operand.hbm [shape: bf16[256,128], index: 1, kind: input, shape index: {}]
  %s2 = inlined_call_operand.vmem [shape: f32[1,128], index: 2, kind: input, shape index: {}]
  %s3 = inlined_call_operand.hbm [shape: bf16[128,256], index: 3, kind: input, shape index: {}]
  %s4 = inlined_call_operand.vmem [shape: f32[1,256], index: 4, kind: input, shape index: {}]
  %s5 = inlined_call_operand.hbm [shape: f32[8,128], index: 5, kind: output, shape index: {0}]
  %s6 = inlined_call_operand.hbm [shape: f32[8,256], index: 6, kind: output, shape index: {1}]
  %7 = xla_tuple %s5, %s6
  %s8 = sld [smem:[#allocation0]]
  $region50: #{tpu_custom_call.1} parent=0
    _
  %s10 = ssub.s32 1, %s8
  %s11 = scalar_select 0, %s10, %s8
  $region1: #{tpu_custom_call.1} parent=0
    #allocation2 [shape = 'u8[8192]{0}', space=vmem, size = 0x2000, scoped, tag = 'input window, operand 0, single buffered']
    #allocation3 [shape = 's32[1]{0}', space=sflag, size = 0x4, scoped, tag = 'scoped memory for tpu_custom_call.1']
    #allocation4 [shape = 's32[1]{0}', space=sflag, size = 0x4, scoped, tag = 'scoped memory for tpu_custom_call.1']
    #allocation5 [shape = 'u8[65536]{0}', space=vmem, size = 0x10000, scoped, tag = 'input window, operand 1, single buffered']
    #allocation6 [shape = 's32[1]{0}', space=sflag, size = 0x4, scoped, tag = 'scoped memory for tpu_custom_call.1']
    #allocation7 [shape = 'u8[65536]{0}', space=vmem, size = 0x10000, scoped, tag = 'input window, operand 3, single buffered']
    #allocation8 [shape = 'u8[4096]{0}', space=vmem, size = 0x1000, scoped, tag = 'output window, operand 0, single buffered']
    #allocation9 [shape = 'u8[8192]{0}', space=vmem, size = 0x2000, scoped, tag = 'output window, operand 1, single buffered']
    #allocation10 [shape = 's32[1]{0}', space=sflag, size = 0x4, scoped, tag = 'scoped memory for tpu_custom_call.1']
    %12 = vsyncpa [#allocation3], 0
    %13 = vsyncpa [#allocation6], 0
    %14 = vsyncpa [#allocation4], 0
    %15 = vsyncpa [#allocation10], 0
    // Predicated region
    $region2: #{tpu_custom_call.1} parent=1 // pred_check
      _
    $region3: #{tpu_custom_call.1} parent=1 // pred_check_branch
      %17 = sbr.rel (0) target = $region5
    $region4: #{tpu_custom_call.1} parent=1 // pred_region
      %s19 = ssub.s32 256, 256
      %20 = vsyncadd [#allocation3], %s19
      %s22 = sshll.u32 [#allocation2], 4
      %s23 = int_to_ptr.vmem [resolvable:$true] %s22
      %25 = dma.hbm_to_vmem [thread:$0]  %s0, 256, %s23, [#allocation3]
    $region5: #{tpu_custom_call.1} parent=1 // pred_fallthru
      _
    // Predicated region
    $region6: #{tpu_custom_call.1} parent=1 // pred_check
      _
    $region7: #{tpu_custom_call.1} parent=1 // pred_check_branch
      %27 = sbr.rel (0) target = $region9
    $region8: #{tpu_custom_call.1} parent=1 // pred_region
      %s29 = ssub.s32 2048, 2048
      %30 = vsyncadd [#allocation6], %s29
      %s31 = sshll.u32 [#allocation5], 4
      %s32 = int_to_ptr.vmem [resolvable:$true] %s31
      %37 = dma.hbm_to_vmem [thread:$0]  %s1, 2048, %s32, [#allocation6], 64, 64, 4
    $region9: #{tpu_custom_call.1} parent=1 // pred_fallthru
      _
    // Predicated region
    $region10: #{tpu_custom_call.1} parent=1 // pred_check
      _
    $region11: #{tpu_custom_call.1} parent=1 // pred_check_branch
      %39 = sbr.rel (0) target = $region13
    $region12: #{tpu_custom_call.1} parent=1 // pred_region
      _
    $region13: #{tpu_custom_call.1} parent=1 // pred_fallthru
      _
    // Predicated region
    $region14: #{tpu_custom_call.1} parent=1 // pred_check
      _
    $region15: #{tpu_custom_call.1} parent=1 // pred_check_branch
      %41 = sbr.rel (0) target = $region17
    $region16: #{tpu_custom_call.1} parent=1 // pred_region
      %s43 = ssub.s32 2048, 2048
      %44 = vsyncadd [#allocation6], %s43
      %s45 = sshll.u32 [#allocation7], 4
      %s46 = int_to_ptr.vmem [resolvable:$true] %s45
      %51 = dma.hbm_to_vmem [thread:$0]  %s3, 2048, %s46, [#allocation6], 128, 128, 8
    $region17: #{tpu_custom_call.1} parent=1 // pred_fallthru
      _
    // Predicated region
    $region18: #{tpu_custom_call.1} parent=1 // pred_check
      _
    $region19: #{tpu_custom_call.1} parent=1 // pred_check_branch
      %53 = sbr.rel (0) target = $region21
    $region20: #{tpu_custom_call.1} parent=1 // pred_region
      _
    $region21: #{tpu_custom_call.1} parent=1 // pred_fallthru
      _
    // Predicated region
    $region22: #{tpu_custom_call.1} parent=1 // pred_check
      _
    $region23: #{tpu_custom_call.1} parent=1 // pred_check_branch
      %55 = sbr.rel (0) target = $region25
    $region24: #{tpu_custom_call.1} parent=1 // pred_region
      %56 = dma.done [#allocation3], 256
    $region25: #{tpu_custom_call.1} parent=1 // pred_fallthru
      _
    // Predicated region
    $region26: #{tpu_custom_call.1} parent=1 // pred_check
      _
    $region27: #{tpu_custom_call.1} parent=1 // pred_check_branch
      %58 = sbr.rel (0) target = $region29
    $region28: #{tpu_custom_call.1} parent=1 // pred_region
      %59 = dma.done [#allocation6], 2048
    $region29: #{tpu_custom_call.1} parent=1 // pred_fallthru
      _
    // Predicated region
    $region30: #{tpu_custom_call.1} parent=1 // pred_check
      _
    $region31: #{tpu_custom_call.1} parent=1 // pred_check_branch
      %61 = sbr.rel (0) target = $region33
    $region32: #{tpu_custom_call.1} parent=1 // pred_region
      %62 = dma.done [#allocation6], 2048
    $region33: #{tpu_custom_call.1} parent=1 // pred_fallthru
      _
    %v64 = vld [vmem:[#allocation2] sm:$0xff]
    %v65 = vld [vmem:[#allocation2 + $0x8] sm:$0xff]
    %v66 = vpack.c.bf16 %v64, %v64
    %v67 = vpack.c.bf16 %v65, %v65
    %v68 = vld [vmem:[#allocation5] sm:$0xf]
    %v69 = vld [vmem:[#allocation5 + $0x4] sm:$0xf]
    %v70 = vld [vmem:[#allocation5 + $0x8] sm:$0xf]
    %v71 = vld [vmem:[#allocation5 + $0xc] sm:$0xf]
    %v72 = vld [vmem:[#allocation5 + $0x10] sm:$0xf]
    %v73 = vld [vmem:[#allocation5 + $0x14] sm:$0xf]
    %v74 = vld [vmem:[#allocation5 + $0x18] sm:$0xf]
    %v75 = vld [vmem:[#allocation5 + $0x1c] sm:$0xf]
    %v76 = vld [vmem:[#allocation5 + $0x20] sm:$0xf]
    %v77 = vld [vmem:[#allocation5 + $0x24] sm:$0xf]
    %v78 = vld [vmem:[#allocation5 + $0x28] sm:$0xf]
    %v79 = vld [vmem:[#allocation5 + $0x2c] sm:$0xf]
    %v80 = vld [vmem:[#allocation5 + $0x30] sm:$0xf]
    %v81 = vld [vmem:[#allocation5 + $0x34] sm:$0xf]
    %v82 = vld [vmem:[#allocation5 + $0x38] sm:$0xf]
    %v83 = vld [vmem:[#allocation5 + $0x3c] sm:$0xf]
    %v84 = vld [vmem:[#allocation5 + $0x40] sm:$0xf]
    %v85 = vld [vmem:[#allocation5 + $0x44] sm:$0xf]
    %v86 = vld [vmem:[#allocation5 + $0x48] sm:$0xf]
    %v87 = vld [vmem:[#allocation5 + $0x4c] sm:$0xf]
    %v88 = vld [vmem:[#allocation5 + $0x50] sm:$0xf]
    %v89 = vld [vmem:[#allocation5 + $0x54] sm:$0xf]
    %v90 = vld [vmem:[#allocation5 + $0x58] sm:$0xf]
    %v91 = vld [vmem:[#allocation5 + $0x5c] sm:$0xf]
    %v92 = vld [vmem:[#allocation5 + $0x60] sm:$0xf]
    %v93 = vld [vmem:[#allocation5 + $0x64] sm:$0xf]
    %v94 = vld [vmem:[#allocation5 + $0x68] sm:$0xf]
    %v95 = vld [vmem:[#allocation5 + $0x6c] sm:$0xf]
    %v96 = vld [vmem:[#allocation5 + $0x70] sm:$0xf]
    %v97 = vld [vmem:[#allocation5 + $0x74] sm:$0xf]
    %v98 = vld [vmem:[#allocation5 + $0x78] sm:$0xf]
    %v99 = vld [vmem:[#allocation5 + $0x7c] sm:$0xf]
    %v100 = vld [vmem:[%s2] sm:$0x1]
    %v102 = vlaneseq
    %v103 = vshrl.u32 %v102, 7
    %v104 = vsub.s32 0, %v103
    %v105 = vrot.slane %v100, %v104
    %v139 = vunpack.c.l.b16 %v68
    %v140 = vunpack.c.l.b16 %v69
    %v141 = vunpack.c.l.b16 %v70
    %v142 = vunpack.c.l.b16 %v71
    %v143 = vunpack.c.l.b16 %v72
    %v144 = vunpack.c.l.b16 %v73
    %v145 = vunpack.c.l.b16 %v74
    %v146 = vunpack.c.l.b16 %v75
    %v147 = vunpack.c.l.b16 %v76
    %v148 = vunpack.c.l.b16 %v77
    %v149 = vunpack.c.l.b16 %v78
    %v150 = vunpack.c.l.b16 %v79
    %v151 = vunpack.c.l.b16 %v80
    %v152 = vunpack.c.l.b16 %v81
    %v153 = vunpack.c.l.b16 %v82
    %v154 = vunpack.c.l.b16 %v83
    %v155 = vunpack.c.l.b16 %v84
    %v156 = vunpack.c.l.b16 %v85
    %v157 = vunpack.c.l.b16 %v86
    %v158 = vunpack.c.l.b16 %v87
    %v159 = vunpack.c.l.b16 %v88
    %v160 = vunpack.c.l.b16 %v89
    %v161 = vunpack.c.l.b16 %v90
    %v162 = vunpack.c.l.b16 %v91
    %v163 = vunpack.c.l.b16 %v92
    %v164 = vunpack.c.l.b16 %v93
    %v165 = vunpack.c.l.b16 %v94
    %v166 = vunpack.c.l.b16 %v95
    %v167 = vunpack.c.l.b16 %v96
    %v168 = vunpack.c.l.b16 %v97
    %v169 = vunpack.c.l.b16 %v98
    %v170 = vunpack.c.l.b16 %v99
    %v171 = vpack.c.b16 %v140, %v139
    %v172 = vpack.c.b16 %v142, %v141
    %v173 = vpack.c.b16 %v144, %v143
    %v174 = vpack.c.b16 %v146, %v145
    %v175 = vpack.c.b16 %v148, %v147
    %v176 = vpack.c.b16 %v150, %v149
    %v177 = vpack.c.b16 %v152, %v151
    %v178 = vpack.c.b16 %v154, %v153
    %v179 = vpack.c.b16 %v156, %v155
    %v180 = vpack.c.b16 %v158, %v157
    %v181 = vpack.c.b16 %v160, %v159
    %v182 = vpack.c.b16 %v162, %v161
    %v183 = vpack.c.b16 %v164, %v163
    %v184 = vpack.c.b16 %v166, %v165
    %v185 = vpack.c.b16 %v168, %v167
    %v186 = vpack.c.b16 %v170, %v169
    %203 = vmatprep.subr.bf16.mxu0 0
    %204 = vmatpush1.bf16.msra.mxu0 %v178
    %205 = vmatprep.subr.bf16.mxu0 0
    %206 = vmatpush1.bf16.msra.mxu0 %v177
    %207 = vmatprep.subr.bf16.mxu0 0
    %208 = vmatpush1.bf16.msra.mxu0 %v176
    %209 = vmatprep.subr.bf16.mxu0 0
    %210 = vmatpush1.bf16.msra.mxu0 %v175
    %211 = vmatprep.subr.bf16.mxu0 0
    %212 = vmatpush1.bf16.msra.mxu0 %v174
    %213 = vmatprep.subr.bf16.mxu0 0
    %214 = vmatpush1.bf16.msra.mxu0 %v173
    %215 = vmatprep.subr.bf16.mxu0 0
    %216 = vmatpush1.bf16.msra.mxu0 %v172
    %217 = vmatprep.subr.bf16.mxu0 0
    %218 = vmatpush1.bf16.msra.mxu0 %v171
    %219 = vmatprep.subr.bf16.mxu0 0
    %220 = vmatpush2.bf16.msra.mxu0 %v186
    %221 = vmatprep.subr.bf16.mxu0 0
    %222 = vmatpush2.bf16.msra.mxu0 %v185
    %223 = vmatprep.subr.bf16.mxu0 0
    %224 = vmatpush2.bf16.msra.mxu0 %v184
    %225 = vmatprep.subr.bf16.mxu0 0
    %226 = vmatpush2.bf16.msra.mxu0 %v183
    %227 = vmatprep.subr.bf16.mxu0 0
    %228 = vmatpush2.bf16.msra.mxu0 %v182
    %229 = vmatprep.subr.bf16.mxu0 0
    %230 = vmatpush2.bf16.msra.mxu0 %v181
    %231 = vmatprep.subr.bf16.mxu0 0
    %232 = vmatpush2.bf16.msra.mxu0 %v180
    %233 = vmatprep.subr.bf16.mxu0 0
    %234 = vmatpush2.bf16.msra.mxu0 %v179
    %235 = vmatprep.mubr.bf16.mxu0 %v67
    %236 = vmatmul.mubr.bf16.gmra.mxu0 %v66
    %v237 = vpop.f32.mrf.mxu0
    %v238 = vadd.f32 %v105, %v237
    %v239 = vpop.f32.mrf.mxu0
    %v240 = vpop.f32.mrf.mxu0
    %v241 = vpop.f32.mrf.mxu0
    %242 = vdwg.mxu0
    %v243 = vtanh.pop %v238
    %244 = vst [vmem:[#allocation8] sm:$0xff] %v243
    %v245 = vpack.c.bf16 %v243, %v243
    %v246 = vld [vmem:[#allocation7] sm:$0xff]
    %v247 = vld [vmem:[#allocation7 + $0x8] sm:$0xff]
    %v248 = vld [vmem:[#allocation7 + $0x10] sm:$0xff]
    %v249 = vld [vmem:[#allocation7 + $0x18] sm:$0xff]
    %v250 = vld [vmem:[#allocation7 + $0x20] sm:$0xff]
    %v251 = vld [vmem:[#allocation7 + $0x28] sm:$0xff]
    %v252 = vld [vmem:[#allocation7 + $0x30] sm:$0xff]
    %v253 = vld [vmem:[#allocation7 + $0x38] sm:$0xff]
    %v254 = vld [vmem:[#allocation7 + $0x40] sm:$0xff]
    %v255 = vld [vmem:[#allocation7 + $0x48] sm:$0xff]
    %v256 = vld [vmem:[#allocation7 + $0x50] sm:$0xff]
    %v257 = vld [vmem:[#allocation7 + $0x58] sm:$0xff]
    %v258 = vld [vmem:[#allocation7 + $0x60] sm:$0xff]
    %v259 = vld [vmem:[#allocation7 + $0x68] sm:$0xff]
    %v260 = vld [vmem:[#allocation7 + $0x70] sm:$0xff]
    %v261 = vld [vmem:[#allocation7 + $0x78] sm:$0xff]
    %v262 = vld [vmem:[%s4] sm:$0x3]
    %v264 = vlaneseq
    %v265 = vshrl.u32 %v264, 7
    %v266 = vsub.s32 0, %v265
    %v267 = vrot.slane %v262, %v266
    %v268 = vlaneseq
    %v269 = vshrl.u32 %v268, 7
    %v270 = vsub.s32 1, %v269
    %v271 = vrot.slane %v262, %v270
    %v290 = vunpack.c.l.b16 %v246
    %v291 = vunpack.c.h.b16 %v246
    %v292 = vunpack.c.l.b16 %v247
    %v293 = vunpack.c.h.b16 %v247
    %v294 = vunpack.c.l.b16 %v248
    %v295 = vunpack.c.h.b16 %v248
    %v296 = vunpack.c.l.b16 %v249
    %v297 = vunpack.c.h.b16 %v249
    %v298 = vunpack.c.l.b16 %v250
    %v299 = vunpack.c.h.b16 %v250
    %v300 = vunpack.c.l.b16 %v251
    %v301 = vunpack.c.h.b16 %v251
    %v302 = vunpack.c.l.b16 %v252
    %v303 = vunpack.c.h.b16 %v252
    %v304 = vunpack.c.l.b16 %v253
    %v305 = vunpack.c.h.b16 %v253
    %v306 = vunpack.c.l.b16 %v254
    %v307 = vunpack.c.h.b16 %v254
    %v308 = vunpack.c.l.b16 %v255
    %v309 = vunpack.c.h.b16 %v255
    %v310 = vunpack.c.l.b16 %v256
    %v311 = vunpack.c.h.b16 %v256
    %v312 = vunpack.c.l.b16 %v257
    %v313 = vunpack.c.h.b16 %v257
    %v314 = vunpack.c.l.b16 %v258
    %v315 = vunpack.c.h.b16 %v258
    %v316 = vunpack.c.l.b16 %v259
    %v317 = vunpack.c.h.b16 %v259
    %v318 = vunpack.c.l.b16 %v260
    %v319 = vunpack.c.h.b16 %v260
    %v320 = vunpack.c.l.b16 %v261
    %v321 = vunpack.c.h.b16 %v261
    %v322 = vpack.c.b16 %v292, %v290
    %v323 = vpack.c.b16 %v293, %v291
    %v324 = vpack.c.b16 %v296, %v294
    %v325 = vpack.c.b16 %v297, %v295
    %v326 = vpack.c.b16 %v300, %v298
    %v327 = vpack.c.b16 %v301, %v299
    %v328 = vpack.c.b16 %v304, %v302
    %v329 = vpack.c.b16 %v305, %v303
    %v330 = vpack.c.b16 %v308, %v306
    %v331 = vpack.c.b16 %v309, %v307
    %v332 = vpack.c.b16 %v312, %v310
    %v333 = vpack.c.b16 %v313, %v311
    %v334 = vpack.c.b16 %v316, %v314
    %v335 = vpack.c.b16 %v317, %v315
    %v336 = vpack.c.b16 %v320, %v318
    %v337 = vpack.c.b16 %v321, %v319
    %354 = vmatprep.subr.bf16.mxu0 %v337
    %355 = vmatpush1.bf16.msra.mxu0 %v336
    %356 = vmatprep.subr.bf16.mxu0 %v335
    %357 = vmatpush1.bf16.msra.mxu0 %v334
    %358 = vmatprep.subr.bf16.mxu0 %v333
    %359 = vmatpush1.bf16.msra.mxu0 %v332
    %360 = vmatprep.subr.bf16.mxu0 %v331
    %361 = vmatpush1.bf16.msra.mxu0 %v330
    %362 = vmatprep.subr.bf16.mxu0 %v329
    %363 = vmatpush1.bf16.msra.mxu0 %v328
    %364 = vmatprep.subr.bf16.mxu0 %v327
    %365 = vmatpush1.bf16.msra.mxu0 %v326
    %366 = vmatprep.subr.bf16.mxu0 %v325
    %367 = vmatpush1.bf16.msra.mxu0 %v324
    %368 = vmatprep.subr.bf16.mxu0 %v323
    %369 = vmatpush1.bf16.msra.mxu0 %v322
    %370 = vmatprep.subr.bf16.mxu0 0
    %371 = vmatpush2.bf16.msra.mxu0 0
    %372 = vmatprep.subr.bf16.mxu0 0
    %373 = vmatpush2.bf16.msra.mxu0 0
    %374 = vmatprep.subr.bf16.mxu0 0
    %375 = vmatpush2.bf16.msra.mxu0 0
    %376 = vmatprep.subr.bf16.mxu0 0
    %377 = vmatpush2.bf16.msra.mxu0 0
    %378 = vmatprep.subr.bf16.mxu0 0
    %379 = vmatpush2.bf16.msra.mxu0 0
    %380 = vmatprep.subr.bf16.mxu0 0
    %381 = vmatpush2.bf16.msra.mxu0 0
    %382 = vmatprep.subr.bf16.mxu0 0
    %383 = vmatpush2.bf16.msra.mxu0 0
    %384 = vmatprep.subr.bf16.mxu0 0
    %385 = vmatpush2.bf16.msra.mxu0 0
    %386 = vmatprep.mubr.bf16.mxu0 0
    %387 = vmatmul.mubr.bf16.gmra.mxu0 %v245
    %v388 = vpop.f32.mrf.mxu0
    %v389 = vadd.f32 %v267, %v388
    %v390 = vpop.f32.mrf.mxu0
    %v391 = vadd.f32 %v271, %v390
    %v392 = vpop.f32.mrf.mxu0
    %v393 = vpop.f32.mrf.mxu0
    %394 = vdwg.mxu0
    %395 = vst [vmem:[#allocation9] sm:$0xff] %v389
    %396 = vst [vmem:[#allocation9 + $0x8] sm:$0xff] %v391
    // Predicated region
    $region34: #{tpu_custom_call.1} parent=1 // pred_check
      _
    $region35: #{tpu_custom_call.1} parent=1 // pred_check_branch
      %398 = sbr.rel (0) target = $region37
    $region36: #{tpu_custom_call.1} parent=1 // pred_region
      %s400 = ssub.s32 128, 128
      %401 = vsyncadd [#allocation4], %s400
      %s403 = sshll.u32 [#allocation8], 4
      %s404 = int_to_ptr.vmem [resolvable:$true] %s403
      %406 = dma.vmem_to_hbm [thread:$0]  %s404, 128, %s5, [#allocation4]
    $region37: #{tpu_custom_call.1} parent=1 // pred_fallthru
      _
    // Predicated region
    $region38: #{tpu_custom_call.1} parent=1 // pred_check
      _
    $region39: #{tpu_custom_call.1} parent=1 // pred_check_branch
      %408 = sbr.rel (0) target = $region41
    $region40: #{tpu_custom_call.1} parent=1 // pred_region
      %s410 = ssub.s32 256, 256
      %411 = vsyncadd [#allocation10], %s410
      %s413 = sshll.u32 [#allocation9], 4
      %s414 = int_to_ptr.vmem [resolvable:$true] %s413
      %416 = dma.vmem_to_hbm [thread:$0]  %s414, 256, %s6, [#allocation10]
    $region41: #{tpu_custom_call.1} parent=1 // pred_fallthru
      _
    // Predicated region
    $region42: #{tpu_custom_call.1} parent=1 // pred_check
      _
    $region43: #{tpu_custom_call.1} parent=1 // pred_check_branch
      %418 = sbr.rel (0) target = $region45
    $region44: #{tpu_custom_call.1} parent=1 // pred_region
      %419 = dma.done [#allocation4], 128
    $region45: #{tpu_custom_call.1} parent=1 // pred_fallthru
      _
    // Predicated region
    $region46: #{tpu_custom_call.1} parent=1 // pred_check
      _
    $region47: #{tpu_custom_call.1} parent=1 // pred_check_branch
      %421 = sbr.rel (0) target = $region49
    $region48: #{tpu_custom_call.1} parent=1 // pred_region
      %422 = dma.done [#allocation10], 256
    $region49: #{tpu_custom_call.1} parent=1 // pred_fallthru
      _
    %423 = vsyncpa [#allocation3], 1
    %424 = vsyncpa [#allocation6], 1
    %425 = vsyncpa [#allocation4], 1
    %426 = vsyncpa [#allocation10], 1

</llo_original>
